<compile_context>
chip_gen: v7x
topology: tpu7x:2x2x1
jax: 0.10.0
libtpu: 0.0.40
codegen_flags: <defaults>
</compile_context>

<pallas_src>
import functools

import jax
import jax.numpy as jnp
from jax.experimental import pallas as pl
from jax.experimental.pallas import tpu as pltpu


def _round_up(x, m):
    return ((x + m - 1) // m) * m


def _cdiv(a, b):
    return (a + b - 1) // b


def _mlp_kernel(x_ref, w1_ref, b1_ref, w2_ref, b2_ref, o_ref, acc_ref):
    """One (batch-tile, hidden-tile) step of y = relu(x @ W1 + b1) @ W2 + b2."""
    k = pl.program_id(1)

    @pl.when(k == 0)
    def _init():
        # Seed the f32 accumulator with b2 broadcast over the batch tile.
        acc_ref[...] = jnp.broadcast_to(b2_ref[...], acc_ref.shape).astype(jnp.float32)

    # First matmul on the MXU (bf16 operands, f32 accumulation); bias + ReLU in f32.
    h = jnp.dot(x_ref[...], w1_ref[...], preferred_element_type=jnp.float32)
    h = jnp.maximum(h + b1_ref[...], 0.0)

    # Second matmul: accumulate this hidden-tile's contribution (bf16 operands).
    acc_ref[...] += jnp.dot(
        h.astype(w2_ref.dtype), w2_ref[...], preferred_element_type=jnp.float32
    )

    @pl.when(k == pl.num_programs(1) - 1)
    def _finalize():
        o_ref[...] = acc_ref[...].astype(o_ref.dtype)


@functools.partial(jax.jit, static_argnames=("block_b", "block_h", "mxu_dtype"))
def mlp_forward(x, w1, b1, w2, b2, *, block_b=512, block_h=512,
                mxu_dtype=jnp.bfloat16):
    """x: [B, D_in]; w1: [D_in, D_h]; b1: [1, D_h]; w2: [D_h, D_out]; b2: [1, D_out]."""
    B, D_in = x.shape
    D_in_w, D_h = w1.shape
    D_h_w, D_out = w2.shape
    assert D_in_w == D_in and D_h_w == D_h
    assert b1.shape == (1, D_h) and b2.shape == (1, D_out)

    out_dtype = x.dtype
    op_dtype = jnp.dtype(mxu_dtype) if mxu_dtype is not None else jnp.dtype(x.dtype)

    # ---- Lane-dense zero padding: every feature axis -> multiple of 128.
    Dip = _round_up(D_in, 128)
    Dhp = _round_up(D_h, 128)
    Dop = _round_up(D_out, 128)

    xp = jnp.pad(x, ((0, 0), (0, Dip - D_in))).astype(op_dtype)
    w1p = jnp.pad(w1, ((0, Dip - D_in), (0, Dhp - D_h))).astype(op_dtype)
    w2p = jnp.pad(w2, ((0, Dhp - D_h), (0, Dop - D_out))).astype(op_dtype)
    b1p = jnp.pad(b1, ((0, 0), (0, Dhp - D_h))).astype(jnp.float32)
    b2p = jnp.pad(b2, ((0, 0), (0, Dop - D_out))).astype(jnp.float32)

    # ---- Batch tile: largest 8-aligned tile <= block_b; if the batch would fit
    # in a single step but is big enough, split it so the "parallel" axis has at
    # least 2 steps (lets v7x's 2 TensorCores both work; harmless on v5e/v6e).
    tb = min(block_b, _round_up(B, 8))
    if B >= 16 and _cdiv(B, tb) < 2:
        tb = _round_up(_cdiv(B, 2), 8)
    nb = _cdiv(B, tb)

    # ---- Hidden tile: stream W1 columns / W2 rows so weights are never fully
    # resident.  Must divide the padded hidden dim exactly (reduction axis must
    # not be ragged, or masked garbage would pollute the accumulator).
    th = min(block_h, Dhp)
    while Dhp % th != 0:
        th -= 128
    nk = Dhp // th

    # ---- Buffering: constant-index_map operands need only a single buffer.
    single_buf = pl.Buffered(1)
    w_mode = pl.Buffered(1) if nk == 1 else pl.Buffered(2)

    in_specs = [
        pl.BlockSpec((tb, Dip), lambda i, k: (i, 0)),                        # x tile
        pl.BlockSpec((Dip, th), lambda i, k: (0, k), pipeline_mode=w_mode),  # W1 slab
        pl.BlockSpec((1, th), lambda i, k: (0, k), pipeline_mode=w_mode),    # b1 slab
        pl.BlockSpec((th, Dop), lambda i, k: (k, 0), pipeline_mode=w_mode),  # W2 slab
        pl.BlockSpec((1, Dop), lambda i, k: (0, 0), pipeline_mode=single_buf),  # b2
    ]
    out_spec = pl.BlockSpec((tb, Dop), lambda i, k: (i, 0))

    # ---- Explicit VMEM budget (x/out double-buffered, weights per w_mode,
    # f32 accumulator scratch), with slack; capped at v7x's 64 MiB physical.
    op_bytes = jnp.dtype(op_dtype).itemsize
    out_bytes = jnp.dtype(out_dtype).itemsize
    nw = 2 if nk > 1 else 1
    vmem_bytes = (
        2 * tb * Dip * op_bytes          # x (double-buffered)
        + nw * Dip * th * op_bytes       # W1
        + nw * 8 * th * 4                # b1 (sublane-padded)
        + nw * th * Dop * op_bytes       # W2
        + 8 * Dop * 4                    # b2
        + 2 * tb * Dop * out_bytes       # out (double-buffered)
        + tb * Dop * 4                   # f32 accumulator
    )
    vmem_limit = min(max(2 * int(vmem_bytes), 16 << 20), 64 << 20)

    flops = 2 * B * D_in * D_h + 2 * B * D_h * D_out
    bytes_accessed = (
        x.size * x.dtype.itemsize
        + w1.size * w1.dtype.itemsize + b1.size * b1.dtype.itemsize
        + w2.size * w2.dtype.itemsize + b2.size * b2.dtype.itemsize
        + B * D_out * out_bytes
    )

    out_padded = pl.pallas_call(
        _mlp_kernel,
        out_shape=jax.ShapeDtypeStruct((B, Dop), out_dtype),
        grid_spec=pltpu.PrefetchScalarGridSpec(
            num_scalar_prefetch=0,
            grid=(nb, nk),
            in_specs=in_specs,
            out_specs=out_spec,
            scratch_shapes=[pltpu.VMEM((tb, Dop), jnp.float32)],
        ),
        compiler_params=pltpu.CompilerParams(
            dimension_semantics=("parallel", "arbitrary"),
            vmem_limit_bytes=vmem_limit,
        ),
        cost_estimate=pl.CostEstimate(
            flops=flops, transcendentals=0, bytes_accessed=bytes_accessed
        ),
    )(xp, w1p, b1p, w2p, b2p)

    return out_padded[:, :D_out]


def init_mlp_params(key, input_shape, output_shape, dtype=jnp.float32):
    """nn.Linear-style init (uniform +-1/sqrt(fan_in)); weights stored [in, out]."""
    k1, k2, k3, k4 = jax.random.split(key, 4)
    bound1 = 1.0 / jnp.sqrt(input_shape)
    bound2 = 1.0 / jnp.sqrt(output_shape)
    w1 = jax.random.uniform(k1, (input_shape, output_shape), dtype, -bound1, bound1)
    b1 = jax.random.uniform(k2, (1, output_shape), dtype, -bound1, bound1)
    w2 = jax.random.uniform(k3, (output_shape, output_shape), dtype, -bound2, bound2)
    b2 = jax.random.uniform(k4, (1, output_shape), dtype, -bound2, bound2)
    return w1, b1, w2, b2


if __name__ == "__main__":
    key = jax.random.PRNGKey(0)
    k_x, k_p = jax.random.split(key)

    batch = 8
    input_shape = 32   # MLP(input_shape=32, output_shape=32)
    output_shape = 32

    x = jax.random.normal(k_x, (batch, input_shape), dtype=jnp.float32)
    w1, b1, w2, b2 = init_mlp_params(k_p, input_shape, output_shape)

    out = mlp_forward(x, w1, b1, w2, b2)
    out = jax.block_until_ready(out)

    # Pure-JAX reference mirroring the kernel's bf16 MXU operands / f32 accum.
    f32 = jnp.float32
    xb = x.astype(jnp.bfloat16).astype(f32)
    w1b = w1.astype(jnp.bfloat16).astype(f32)
    w2b = w2.astype(jnp.bfloat16).astype(f32)
    h_ref = jnp.maximum(xb @ w1b + b1, 0.0)
    ref = h_ref.astype(jnp.bfloat16).astype(f32) @ w2b + b2

    assert out.shape == (batch, output_shape)
    assert jnp.allclose(out, ref, atol=1e-3, rtol=1e-3), float(
        jnp.max(jnp.abs(out - ref))
    )

    print("KERNEL_OK")
</pallas_src>

<mosaic_0001>
module attributes {stable_mosaic.version = 11 : i64} {
  func.func @_mlp_kernel(%arg0: i32, %arg1: i32, %arg2: memref<8x128xbf16, #tpu.memory_space<vmem>>, %arg3: memref<128x128xbf16, #tpu.memory_space<vmem>>, %arg4: memref<1x128xf32, #tpu.memory_space<vmem>>, %arg5: memref<128x128xbf16, #tpu.memory_space<vmem>>, %arg6: memref<1x128xf32, #tpu.memory_space<vmem>>, %arg7: memref<8x128xf32, #tpu.memory_space<vmem>>, %arg8: memref<8x128xf32, #tpu.memory_space<vmem>>) attributes {dimension_semantics = [#tpu.dimension_semantics<parallel>, #tpu.dimension_semantics<arbitrary>], iteration_bounds = array<i64: 1, 1>, scalar_prefetch = 0 : i64, scratch_operands = 1 : i64, tpu.core_type = #tpu.core_type<tc>, window_params = [{transform_indices = @transform_0, window_bounds = array<i64: 8, 128>}, {pipeline_mode = #tpu.pipeline_mode<synchronous>, transform_indices = @transform_1, window_bounds = array<i64: 128, 128>}, {pipeline_mode = #tpu.pipeline_mode<synchronous>, transform_indices = @transform_2, window_bounds = array<i64: 1, 128>}, {pipeline_mode = #tpu.pipeline_mode<synchronous>, transform_indices = @transform_3, window_bounds = array<i64: 128, 128>}, {pipeline_mode = #tpu.pipeline_mode<synchronous>, transform_indices = @transform_4, window_bounds = array<i64: 1, 128>}, {transform_indices = @transform_5, window_bounds = array<i64: 8, 128>}]} {
    %c0_i32 = arith.constant 0 : i32
    %0 = arith.cmpi eq, %arg1, %c0_i32 : i32
    %1 = arith.extui %0 : i1 to i32
    %c0_i32_0 = arith.constant 0 : i32
    %2 = arith.cmpi ne, %1, %c0_i32_0 : i32
    scf.if %2 {
      %c0_16 = arith.constant 0 : index
      %c0_17 = arith.constant 0 : index
      %20 = vector.load %arg6[%c0_16, %c0_17] : memref<1x128xf32, #tpu.memory_space<vmem>>, vector<1x128xf32>
      %21 = vector.shape_cast %20 : vector<1x128xf32> to vector<1x128xf32>
      %22 = vector.broadcast %21 : vector<1x128xf32> to vector<8x128xf32>
      %c0_18 = arith.constant 0 : index
      %c0_19 = arith.constant 0 : index
      %23 = vector.load %arg8[%c0_18, %c0_19] : memref<8x128xf32, #tpu.memory_space<vmem>>, vector<8x128xf32>
      tpu.vector_store %arg8[%c0_18, %c0_19], %22 {strides = array<i32>} : memref<8x128xf32, #tpu.memory_space<vmem>>, vector<8x128xf32>,
    } else {
    }
    %c0 = arith.constant 0 : index
    %c0_1 = arith.constant 0 : index
    %3 = vector.load %arg2[%c0, %c0_1] : memref<8x128xbf16, #tpu.memory_space<vmem>>, vector<8x128xbf16>
    %c0_2 = arith.constant 0 : index
    %c0_3 = arith.constant 0 : index
    %4 = vector.load %arg3[%c0_2, %c0_3] : memref<128x128xbf16, #tpu.memory_space<vmem>>, vector<128x128xbf16>
    %cst = arith.constant dense<0.000000e+00> : vector<8x128xf32>
    %5 = tpu.matmul %3, %4, %cst {dimension_numbers = #tpu.dot_dimension_numbers<[1], [0], [0], [1], [0, 0, 1, 1], [], []>} : vector<8x128xbf16>, vector<128x128xbf16>, vector<8x128xf32> -> vector<8x128xf32>
    %c0_4 = arith.constant 0 : index
    %c0_5 = arith.constant 0 : index
    %6 = vector.load %arg4[%c0_4, %c0_5] : memref<1x128xf32, #tpu.memory_space<vmem>>, vector<1x128xf32>
    %7 = vector.broadcast %6 : vector<1x128xf32> to vector<8x128xf32>
    %8 = arith.addf %5, %7 : vector<8x128xf32>
    %cst_6 = arith.constant 0.000000e+00 : f32
    %9 = vector.broadcast %cst_6 : f32 to vector<8x128xf32>
    %10 = arith.maximumf %8, %9 : vector<8x128xf32>
    %c0_7 = arith.constant 0 : index
    %c0_8 = arith.constant 0 : index
    %11 = vector.load %arg8[%c0_7, %c0_8] : memref<8x128xf32, #tpu.memory_space<vmem>>, vector<8x128xf32>
    %12 = arith.truncf %10 : vector<8x128xf32> to vector<8x128xbf16>
    %c0_9 = arith.constant 0 : index
    %c0_10 = arith.constant 0 : index
    %13 = vector.load %arg5[%c0_9, %c0_10] : memref<128x128xbf16, #tpu.memory_space<vmem>>, vector<128x128xbf16>
    %cst_11 = arith.constant dense<0.000000e+00> : vector<8x128xf32>
    %14 = tpu.matmul %12, %13, %cst_11 {dimension_numbers = #tpu.dot_dimension_numbers<[1], [0], [0], [1], [0, 0, 1, 1], [], []>} : vector<8x128xbf16>, vector<128x128xbf16>, vector<8x128xf32> -> vector<8x128xf32>
    %15 = arith.addf %11, %14 : vector<8x128xf32>
    %c0_12 = arith.constant 0 : index
    %c0_13 = arith.constant 0 : index
    %16 = vector.load %arg8[%c0_12, %c0_13] : memref<8x128xf32, #tpu.memory_space<vmem>>, vector<8x128xf32>
    tpu.vector_store %arg8[%c0_12, %c0_13], %15 {strides = array<i32>} : memref<8x128xf32, #tpu.memory_space<vmem>>, vector<8x128xf32>,
    %c0_i32_14 = arith.constant 0 : i32
    %17 = arith.cmpi eq, %arg1, %c0_i32_14 : i32
    %18 = arith.extui %17 : i1 to i32
    %c0_i32_15 = arith.constant 0 : i32
    %19 = arith.cmpi ne, %18, %c0_i32_15 : i32
    scf.if %19 {
      %c0_16 = arith.constant 0 : index
      %c0_17 = arith.constant 0 : index
      %20 = vector.load %arg8[%c0_16, %c0_17] : memref<8x128xf32, #tpu.memory_space<vmem>>, vector<8x128xf32>
      %c0_18 = arith.constant 0 : index
      %c0_19 = arith.constant 0 : index
      %21 = vector.load %arg7[%c0_18, %c0_19] : memref<8x128xf32, #tpu.memory_space<vmem>>, vector<8x128xf32>
      tpu.vector_store %arg7[%c0_18, %c0_19], %20 {strides = array<i32>} : memref<8x128xf32, #tpu.memory_space<vmem>>, vector<8x128xf32>,
    } else {
    }
    return
  }
  func.func @transform_0(%arg0: i32, %arg1: i32) -> (i32, i32) {
    %c0_i32 = arith.constant 0 : i32
    %c0_i32_0 = arith.constant 0 : i32
    return %arg0, %c0_i32 : i32, i32
  }
  func.func @transform_1(%arg0: i32, %arg1: i32) -> (i32, i32) {
    %c0_i32 = arith.constant 0 : i32
    %c0_i32_0 = arith.constant 0 : i32
    return %c0_i32, %arg1 : i32, i32
  }
  func.func @transform_2(%arg0: i32, %arg1: i32) -> (i32, i32) {
    %c0_i32 = arith.constant 0 : i32
    %c0_i32_0 = arith.constant 0 : i32
    return %c0_i32, %arg1 : i32, i32
  }
  func.func @transform_3(%arg0: i32, %arg1: i32) -> (i32, i32) {
    %c0_i32 = arith.constant 0 : i32
    %c0_i32_0 = arith.constant 0 : i32
    return %arg1, %c0_i32 : i32, i32
  }
  func.func @transform_4(%arg0: i32, %arg1: i32) -> (i32, i32) {
    %c0_i32 = arith.constant 0 : i32
    %c0_i32_0 = arith.constant 0 : i32
    %c0_i32_1 = arith.constant 0 : i32
    return %c0_i32, %c0_i32_0 : i32, i32
  }
  func.func @transform_5(%arg0: i32, %arg1: i32) -> (i32, i32) {
    %c0_i32 = arith.constant 0 : i32
    %c0_i32_0 = arith.constant 0 : i32
    return %arg0, %c0_i32 : i32, i32
  }
}

</mosaic_0001>

<llo_original>
// kernel: mlp_forward.1
$region0: #{mlp_forward.1}
  #allocation0 [shape = 'u32[]', space=smem, size = 0x4, offset = 0x4, fixed_abs, tag = 'smem constant byte address 0x4 - core index']
  #allocation1 [shape = 'u32[144,128]{1,0:T(1,128)}', space=vmem, size = 0x12000, scoped, tag = 'internal scratch']
  #allocation2 [shape = 'f32[8,128]{1,0:T(8,128)}', space=vmem, size = 0x1000, scoped, tag = 'scratch operand']
  %s0 = inlined_call_operand.vmem [shape: bf16[8,128], index: 0, kind: input, shape index: {}]
  %s1 = inlined_call_operand.vmem [shape: bf16[128,128], index: 1, kind: input, shape index: {}]
  %s2 = inlined_call_operand.vmem [shape: f32[1,128], index: 2, kind: input, shape index: {}]
  %s3 = inlined_call_operand.vmem [shape: bf16[128,128], index: 3, kind: input, shape index: {}]
  %s4 = inlined_call_operand.vmem [shape: f32[1,128], index: 4, kind: input, shape index: {}]
  %s5 = inlined_call_operand.hbm [shape: f32[8,128], index: 5, kind: output, shape index: {}]
  %s6 = sld [smem:[#allocation0]]
  $region38: #{mlp_forward.1} parent=0
    _
  %s8 = ssub.s32 1, %s6
  %s9 = scalar_select 0, %s8, %s6
  $region1: #{mlp_forward.1} parent=0
    #allocation3 [shape = 'u8[4096]{0}', space=vmem, size = 0x1000, scoped, tag = 'output window, operand 0, single buffered']
    #allocation4 [shape = 's32[1]{0}', space=sflag, size = 0x4, scoped, tag = 'scoped memory for mlp_forward.1']
    %10 = vsyncpa [#allocation4], 0
    // Predicated region
    $region2: #{mlp_forward.1} parent=1 // pred_check
      _
    $region3: #{mlp_forward.1} parent=1 // pred_check_branch
      %12 = sbr.rel (0) target = $region5
    $region4: #{mlp_forward.1} parent=1 // pred_region
      _
    $region5: #{mlp_forward.1} parent=1 // pred_fallthru
      _
    // Predicated region
    $region6: #{mlp_forward.1} parent=1 // pred_check
      _
    $region7: #{mlp_forward.1} parent=1 // pred_check_branch
      %14 = sbr.rel (0) target = $region9
    $region8: #{mlp_forward.1} parent=1 // pred_region
      _
    $region9: #{mlp_forward.1} parent=1 // pred_fallthru
      _
    // Predicated region
    $region10: #{mlp_forward.1} parent=1 // pred_check
      _
    $region11: #{mlp_forward.1} parent=1 // pred_check_branch
      %16 = sbr.rel (0) target = $region13
    $region12: #{mlp_forward.1} parent=1 // pred_region
      _
    $region13: #{mlp_forward.1} parent=1 // pred_fallthru
      _
    // Predicated region
    $region14: #{mlp_forward.1} parent=1 // pred_check
      _
    $region15: #{mlp_forward.1} parent=1 // pred_check_branch
      %18 = sbr.rel (0) target = $region17
    $region16: #{mlp_forward.1} parent=1 // pred_region
      _
    $region17: #{mlp_forward.1} parent=1 // pred_fallthru
      _
    // Predicated region
    $region18: #{mlp_forward.1} parent=1 // pred_check
      _
    $region19: #{mlp_forward.1} parent=1 // pred_check_branch
      %20 = sbr.rel (0) target = $region21
    $region20: #{mlp_forward.1} parent=1 // pred_region
      _
    $region21: #{mlp_forward.1} parent=1 // pred_fallthru
      _
    %p22 = scmp.eq.s32.totalorder 0, 0
    // Predicated region
    $region22: #{mlp_forward.1} parent=1 // pred_check
      %p23 = pneg %p22
    $region23: #{mlp_forward.1} parent=1 // pred_check_branch
      %25 = sbr.rel (%p23) target = $region25
    $region24: #{mlp_forward.1} parent=1 // pred_region
      %v26 = vld [vmem:[%s4] sm:$0x1]
      %v28 = vlaneseq
      %v29 = vshrl.u32 %v28, 7
      %v30 = vsub.s32 0, %v29
      %v31 = vrot.slane %v26, %v30
      %33 = vst [vmem:[#allocation2] sm:$0xff] %v31
    $region25: #{mlp_forward.1} parent=1 // pred_fallthru
      _
    %v34 = vld [vmem:[%s0] sm:$0xf]
    %v35 = vld [vmem:[%s1] sm:$0xf]
    %v36 = vld [vmem:[%s1 + $0x4] sm:$0xf]
    %v37 = vld [vmem:[%s1 + $0x8] sm:$0xf]
    %v38 = vld [vmem:[%s1 + $0xc] sm:$0xf]
    %v39 = vld [vmem:[%s1 + $0x10] sm:$0xf]
    %v40 = vld [vmem:[%s1 + $0x14] sm:$0xf]
    %v41 = vld [vmem:[%s1 + $0x18] sm:$0xf]
    %v42 = vld [vmem:[%s1 + $0x1c] sm:$0xf]
    %v43 = vld [vmem:[%s1 + $0x20] sm:$0xf]
    %v44 = vld [vmem:[%s1 + $0x24] sm:$0xf]
    %v45 = vld [vmem:[%s1 + $0x28] sm:$0xf]
    %v46 = vld [vmem:[%s1 + $0x2c] sm:$0xf]
    %v47 = vld [vmem:[%s1 + $0x30] sm:$0xf]
    %v48 = vld [vmem:[%s1 + $0x34] sm:$0xf]
    %v49 = vld [vmem:[%s1 + $0x38] sm:$0xf]
    %v50 = vld [vmem:[%s1 + $0x3c] sm:$0xf]
    %v51 = vld [vmem:[%s2] sm:$0x1]
    %v53 = vlaneseq
    %v54 = vshrl.u32 %v53, 7
    %v55 = vsub.s32 0, %v54
    %v56 = vrot.slane %v51, %v55
    %v74 = vunpack.c.l.b16 %v35
    %v75 = vunpack.c.l.b16 %v36
    %v76 = vunpack.c.l.b16 %v37
    %v77 = vunpack.c.l.b16 %v38
    %v78 = vunpack.c.l.b16 %v39
    %v79 = vunpack.c.l.b16 %v40
    %v80 = vunpack.c.l.b16 %v41
    %v81 = vunpack.c.l.b16 %v42
    %v82 = vunpack.c.l.b16 %v43
    %v83 = vunpack.c.l.b16 %v44
    %v84 = vunpack.c.l.b16 %v45
    %v85 = vunpack.c.l.b16 %v46
    %v86 = vunpack.c.l.b16 %v47
    %v87 = vunpack.c.l.b16 %v48
    %v88 = vunpack.c.l.b16 %v49
    %v89 = vunpack.c.l.b16 %v50
    %v90 = vpack.c.b16 %v75, %v74
    %v91 = vpack.c.b16 %v77, %v76
    %v92 = vpack.c.b16 %v79, %v78
    %v93 = vpack.c.b16 %v81, %v80
    %v94 = vpack.c.b16 %v83, %v82
    %v95 = vpack.c.b16 %v85, %v84
    %v96 = vpack.c.b16 %v87, %v86
    %v97 = vpack.c.b16 %v89, %v88
    %106 = vmatprep.subr.bf16.mxu0 0
    %107 = vmatpush1.bf16.msra.mxu0 %v90
    %108 = vmatprep.subr.bf16.mxu0 0
    %109 = vmatpush1.bf16.msra.mxu0 %v91
    %110 = vmatprep.subr.bf16.mxu0 0
    %111 = vmatpush1.bf16.msra.mxu0 %v92
    %112 = vmatprep.subr.bf16.mxu0 0
    %113 = vmatpush1.bf16.msra.mxu0 %v93
    %114 = vmatprep.subr.bf16.mxu0 0
    %115 = vmatpush1.bf16.msra.mxu0 %v94
    %116 = vmatprep.subr.bf16.mxu0 0
    %117 = vmatpush1.bf16.msra.mxu0 %v95
    %118 = vmatprep.subr.bf16.mxu0 0
    %119 = vmatpush1.bf16.msra.mxu0 %v96
    %120 = vmatprep.subr.bf16.mxu0 0
    %121 = vmatpush1.bf16.msra.mxu0 %v97
    %122 = vmatprep.subr.bf16.mxu0 0
    %123 = vmatpush1.bf16.msra.mxu0 0
    %124 = vmatprep.subr.bf16.mxu0 0
    %125 = vmatpush1.bf16.msra.mxu0 0
    %126 = vmatprep.subr.bf16.mxu0 0
    %127 = vmatpush1.bf16.msra.mxu0 0
    %128 = vmatprep.subr.bf16.mxu0 0
    %129 = vmatpush1.bf16.msra.mxu0 0
    %130 = vmatprep.subr.bf16.mxu0 0
    %131 = vmatpush1.bf16.msra.mxu0 0
    %132 = vmatprep.subr.bf16.mxu0 0
    %133 = vmatpush1.bf16.msra.mxu0 0
    %134 = vmatprep.subr.bf16.mxu0 0
    %135 = vmatpush1.bf16.msra.mxu0 0
    %136 = vmatprep.subr.bf16.mxu0 0
    %137 = vmatpush1.bf16.msra.mxu0 0
    %138 = vmatprep.mubr.bf16.mxu0 0
    %139 = vmatmul.mubr.bf16.gmra.mrb[0].mxu0 %v34
    %v140 = vpop.f32.mrb[0].mxu0
    %v141 = vadd.f32 %v56, %v140
    %v142 = vpop.f32.mrb[0].mxu0
    %v143 = vpop.f32.mrb[0].mxu0
    %v144 = vpop.f32.mrb[0].mxu0
    %145 = vdwg.mxu0
    %v146 = vmax.f32 %v141, 0.0
    %v147 = vld [vmem:[#allocation2] sm:$0xff]
    %v148 = vpack.c.bf16 %v146, %v146
    %v149 = vld [vmem:[%s3] sm:$0xf]
    %v150 = vld [vmem:[%s3 + $0x4] sm:$0xf]
    %v151 = vld [vmem:[%s3 + $0x8] sm:$0xf]
    %v152 = vld [vmem:[%s3 + $0xc] sm:$0xf]
    %v153 = vld [vmem:[%s3 + $0x10] sm:$0xf]
    %v154 = vld [vmem:[%s3 + $0x14] sm:$0xf]
    %v155 = vld [vmem:[%s3 + $0x18] sm:$0xf]
    %v156 = vld [vmem:[%s3 + $0x1c] sm:$0xf]
    %v157 = vld [vmem:[%s3 + $0x20] sm:$0xf]
    %v158 = vld [vmem:[%s3 + $0x24] sm:$0xf]
    %v159 = vld [vmem:[%s3 + $0x28] sm:$0xf]
    %v160 = vld [vmem:[%s3 + $0x2c] sm:$0xf]
    %v161 = vld [vmem:[%s3 + $0x30] sm:$0xf]
    %v162 = vld [vmem:[%s3 + $0x34] sm:$0xf]
    %v163 = vld [vmem:[%s3 + $0x38] sm:$0xf]
    %v164 = vld [vmem:[%s3 + $0x3c] sm:$0xf]
    %v181 = vunpack.c.l.b16 %v149
    %v182 = vunpack.c.l.b16 %v150
    %v183 = vunpack.c.l.b16 %v151
    %v184 = vunpack.c.l.b16 %v152
    %v185 = vunpack.c.l.b16 %v153
    %v186 = vunpack.c.l.b16 %v154
    %v187 = vunpack.c.l.b16 %v155
    %v188 = vunpack.c.l.b16 %v156
    %v189 = vunpack.c.l.b16 %v157
    %v190 = vunpack.c.l.b16 %v158
    %v191 = vunpack.c.l.b16 %v159
    %v192 = vunpack.c.l.b16 %v160
    %v193 = vunpack.c.l.b16 %v161
    %v194 = vunpack.c.l.b16 %v162
    %v195 = vunpack.c.l.b16 %v163
    %v196 = vunpack.c.l.b16 %v164
    %v197 = vpack.c.b16 %v182, %v181
    %v198 = vpack.c.b16 %v184, %v183
    %v199 = vpack.c.b16 %v186, %v185
    %v200 = vpack.c.b16 %v188, %v187
    %v201 = vpack.c.b16 %v190, %v189
    %v202 = vpack.c.b16 %v192, %v191
    %v203 = vpack.c.b16 %v194, %v193
    %v204 = vpack.c.b16 %v196, %v195
    %213 = vmatprep.subr.bf16.mxu0 0
    %214 = vmatpush1.bf16.msra.mxu0 %v197
    %215 = vmatprep.subr.bf16.mxu0 0
    %216 = vmatpush1.bf16.msra.mxu0 %v198
    %217 = vmatprep.subr.bf16.mxu0 0
    %218 = vmatpush1.bf16.msra.mxu0 %v199
    %219 = vmatprep.subr.bf16.mxu0 0
    %220 = vmatpush1.bf16.msra.mxu0 %v200
    %221 = vmatprep.subr.bf16.mxu0 0
    %222 = vmatpush1.bf16.msra.mxu0 %v201
    %223 = vmatprep.subr.bf16.mxu0 0
    %224 = vmatpush1.bf16.msra.mxu0 %v202
    %225 = vmatprep.subr.bf16.mxu0 0
    %226 = vmatpush1.bf16.msra.mxu0 %v203
    %227 = vmatprep.subr.bf16.mxu0 0
    %228 = vmatpush1.bf16.msra.mxu0 %v204
    %229 = vmatprep.subr.bf16.mxu0 0
    %230 = vmatpush1.bf16.msra.mxu0 0
    %231 = vmatprep.subr.bf16.mxu0 0
    %232 = vmatpush1.bf16.msra.mxu0 0
    %233 = vmatprep.subr.bf16.mxu0 0
    %234 = vmatpush1.bf16.msra.mxu0 0
    %235 = vmatprep.subr.bf16.mxu0 0
    %236 = vmatpush1.bf16.msra.mxu0 0
    %237 = vmatprep.subr.bf16.mxu0 0
    %238 = vmatpush1.bf16.msra.mxu0 0
    %239 = vmatprep.subr.bf16.mxu0 0
    %240 = vmatpush1.bf16.msra.mxu0 0
    %241 = vmatprep.subr.bf16.mxu0 0
    %242 = vmatpush1.bf16.msra.mxu0 0
    %243 = vmatprep.subr.bf16.mxu0 0
    %244 = vmatpush1.bf16.msra.mxu0 0
    %245 = vmatprep.mubr.bf16.mxu0 0
    %246 = vmatmul.mubr.bf16.gmra.mrb[0].mxu0 %v148
    %v247 = vpop.f32.mrb[0].mxu0
    %v248 = vadd.f32 0.0, %v247
    %v249 = vpop.f32.mrb[0].mxu0
    %v250 = vpop.f32.mrb[0].mxu0
    %v251 = vpop.f32.mrb[0].mxu0
    %252 = vdwg.mxu0
    %v253 = vadd.f32 %v147, %v248
    %254 = vst [vmem:[#allocation2] sm:$0xff] %v253
    // Predicated region
    $region26: #{mlp_forward.1} parent=1 // pred_check
      %p255 = pneg %p22
    $region27: #{mlp_forward.1} parent=1 // pred_check_branch
      %257 = sbr.rel (%p255) target = $region29
    $region28: #{mlp_forward.1} parent=1 // pred_region
      %v258 = vld [vmem:[#allocation2] sm:$0xff]
      %259 = vst [vmem:[#allocation3] sm:$0xff] %v258
    $region29: #{mlp_forward.1} parent=1 // pred_fallthru
      _
    // Predicated region
    $region30: #{mlp_forward.1} parent=1 // pred_check
      _
    $region31: #{mlp_forward.1} parent=1 // pred_check_branch
      %261 = sbr.rel (0) target = $region33
    $region32: #{mlp_forward.1} parent=1 // pred_region
      %s263 = ssub.s32 128, 128
      %264 = vsyncadd [#allocation4], %s263
      %s266 = sshll.u32 [#allocation3], 4
      %s267 = int_to_ptr.vmem [resolvable:$true] %s266
      %269 = dma.vmem_to_hbm [thread:$0]  %s267, 128, %s5, [#allocation4]
    $region33: #{mlp_forward.1} parent=1 // pred_fallthru
      _
    // Predicated region
    $region34: #{mlp_forward.1} parent=1 // pred_check
      _
    $region35: #{mlp_forward.1} parent=1 // pred_check_branch
      %271 = sbr.rel (0) target = $region37
    $region36: #{mlp_forward.1} parent=1 // pred_region
      %272 = dma.done [#allocation4], 128
    $region37: #{mlp_forward.1} parent=1 // pred_fallthru
      _
    %273 = vsyncpa [#allocation4], 1

</llo_original>
